<compile_context>
chip_gen: v7x
topology: tpu7x:2x2x1
jax: 0.10.0
libtpu: 0.0.40
codegen_flags: <defaults>
</compile_context>

<pallas_src>
import functools

import jax
import jax.numpy as jnp
from jax import lax
from jax.experimental import pallas as pl
from jax.experimental.pallas import tpu as pltpu

L1_COEF = 50.0
L2_COEF = 100.0

_LANE = 128
_SUBLANE = 8
_NUM_CORE_CHUNKS = 2        # leading "parallel" axis: 2nd TensorCore on v7x
_DEFAULT_TILE_ROWS = 8192   # 4 MiB f32 image block per stream
_MAX_SUB_ROWS = 1024        # compute sub-tile inside a DMA block


def _round_up(x, m):
    return (x + m - 1) // m * m


def _pick_sub_rows(tile_rows):
    """Largest compute sub-chunk (<=1024 rows) that divides the DMA block."""
    if tile_rows <= _MAX_SUB_ROWS:
        return tile_rows
    for s in (1024, 512, 256, 128, 64, 32, 16, 8):
        if tile_rows % s == 0:
            return s
    return 8  # unreachable: tile_rows is always a multiple of 8


def _lane_view(x):
    """Flatten to a zero-padded lane-dense (rows, 128) view, rows % 8 == 0.

    When x.size is already a multiple of 8*128 this is a pure reshape (no HBM
    copy).  Otherwise jnp.pad adds < 1024 zeros (one extra pass over the
    array; unavoidable without a 128-aligned flat size).  Since BOTH members
    of each pair get identical zero padding, padded elements contribute 0.
    """
    flat = jnp.reshape(x, (-1,))
    n = flat.size
    rows = _round_up(pl.cdiv(n, _LANE), _SUBLANE)
    pad = rows * _LANE - n
    if pad:
        flat = jnp.pad(flat, (0, pad))
    return jnp.reshape(flat, (rows, _LANE)), n, rows


def _generator_loss_kernel(sf_ref, af_ref, ar_ref, fi_ref, ri_ref, out_ref,
                           l1_acc, mse_acc, *,
                           inv_n_sf, inv_n_act, inv_n_img,
                           img_rows, act_rows,
                           img_tile_rows, act_tile_rows,
                           act_tiles, tiles_per_chunk, sub_rows):
    chunk = pl.program_id(0)   # "parallel" axis (per-TensorCore on v7x)
    step = pl.program_id(1)    # "arbitrary" reduction axis

    @pl.when(step == 0)
    def _init():
        l1_acc[...] = jnp.zeros_like(l1_acc)
        mse_acc[...] = jnp.zeros_like(mse_acc)

    # ---- hot loop: one image block of the L1 term (vld + VALU only) --------
    # Row mask: lane padding is zeros in both images (contributes 0), so only
    # rows past the true end (partial last block / clamped extra steps) need
    # masking.  Mask is pure VALU and free in this mem-bound loop.
    base_row = (chunk * tiles_per_chunk + step) * img_tile_rows
    row_iota = lax.broadcasted_iota(jnp.int32, (sub_rows, _LANE), 0)  # hoisted

    n_sub = img_tile_rows // sub_rows

    @pl.loop(0, n_sub)
    def _l1(j):
        start = pl.multiple_of(j * sub_rows, sub_rows)
        fi = fi_ref[pl.ds(start, sub_rows), :].astype(jnp.float32)
        ri = ri_ref[pl.ds(start, sub_rows), :].astype(jnp.float32)
        valid = row_iota < (img_rows - (base_row + start))
        d = jnp.where(valid, jnp.abs(fi - ri), 0.0)
        # Reshape stays within (8,128) tile boundaries -> view + VALU adds.
        l1_acc[...] += jnp.sum(d.reshape(-1, _SUBLANE, _LANE), axis=0)

    # ---- feature-matching MSE: streamed along the same axis, chunk 0 only --
    @pl.when(jnp.logical_and(chunk == 0, step < act_tiles))
    def _mse():
        af = af_ref[...].astype(jnp.float32)
        ar = ar_ref[...].astype(jnp.float32)
        arow = lax.broadcasted_iota(jnp.int32, (act_tile_rows, _LANE), 0)
        valid = arow < (act_rows - step * act_tile_rows)
        dd = jnp.where(valid, af - ar, 0.0)
        mse_acc[...] += jnp.sum((dd * dd).reshape(-1, _SUBLANE, _LANE), axis=0)

    # ---- finalize: single cross-lane reduce + tiny BCE, once per chunk -----
    @pl.when(step == tiles_per_chunk - 1)
    def _finalize():
        l1 = jnp.sum(l1_acc[...]) * inv_n_img
        mse = jnp.sum(mse_acc[...]) * inv_n_act
        sf = sf_ref[...].astype(jnp.float32)
        # PyTorch BCELoss clamps log at -100; labels are all ones.
        bce = -jnp.sum(jnp.maximum(jnp.log(sf), -100.0)) * inv_n_sf
        partial = L1_COEF * l1 + L2_COEF * mse + jnp.where(chunk == 0, bce, 0.0)
        out_ref[...] = jnp.broadcast_to(partial, out_ref.shape)


def _bce_only_kernel(sf_ref, out_ref):
    sf = sf_ref[...].astype(jnp.float32)
    out_ref[0, 0] = -jnp.sum(jnp.maximum(jnp.log(sf), -100.0)) / sf.size


def generator_loss(Sf, activation_fake=None, activation_real=None,
                   fake_img=None, real_img=None, *,
                   max_tile_rows=_DEFAULT_TILE_ROWS):
    """JAX/Pallas equivalent of GeneratorLoss.forward.  Returns a scalar f32."""
    sf2 = jnp.reshape(Sf, (1, -1))   # native dtype; cast inside the kernel
    n_sf = sf2.size
    vmem_spec = pl.BlockSpec(memory_space=pltpu.MemorySpace.VMEM)

    if activation_fake is None:
        # Tiny BCE-only path: dispatch overhead dominates, keep it trivial.
        out = pl.pallas_call(
            _bce_only_kernel,
            out_shape=jax.ShapeDtypeStruct((1, 1), jnp.float32),
            in_specs=[vmem_spec],
            out_specs=vmem_spec,
        )(sf2)
        return out[0, 0]

    af, n_act, act_rows = _lane_view(activation_fake)
    ar, _, _ = _lane_view(activation_real)
    fi, n_img, img_rows = _lane_view(fake_img)
    ri, _, _ = _lane_view(real_img)

    # ---- image (L1) tiling: big lane-dense blocks, split over 2 chunks -----
    tile_rows = min(_round_up(max_tile_rows, _SUBLANE), img_rows)
    img_tiles = pl.cdiv(img_rows, tile_rows)
    num_chunks = _NUM_CORE_CHUNKS if img_tiles >= _NUM_CORE_CHUNKS else 1
    tiles_per_chunk = pl.cdiv(img_tiles, num_chunks)
    sub_rows = _pick_sub_rows(tile_rows)

    # ---- activation (MSE) tiling: streamed along the same axis (chunk 0) ---
    act_tile_rows = min(_round_up(pl.cdiv(act_rows, tiles_per_chunk), _SUBLANE),
                        act_rows)
    act_tiles = pl.cdiv(act_rows, act_tile_rows)   # guaranteed <= tiles_per_chunk

    kernel = functools.partial(
        _generator_loss_kernel,
        inv_n_sf=1.0 / n_sf, inv_n_act=1.0 / n_act, inv_n_img=1.0 / n_img,
        img_rows=img_rows, act_rows=act_rows,
        img_tile_rows=tile_rows, act_tile_rows=act_tile_rows,
        act_tiles=act_tiles, tiles_per_chunk=tiles_per_chunk,
        sub_rows=sub_rows)

    last_img_block = img_tiles - 1
    last_act_block = act_tiles - 1

    def img_map(c, i):
        # Clamp: steps past the last real block re-point at it (no re-DMA,
        # the in-kernel row mask zeroes their contribution).
        return (jnp.minimum(c * tiles_per_chunk + i, last_img_block), 0)

    def act_map(c, i):
        # Chunk 0 streams the activations; other chunks keep block 0 resident.
        return (jnp.where(c == 0, jnp.minimum(i, last_act_block), 0), 0)

    img_spec = pl.BlockSpec((tile_rows, _LANE), img_map)
    act_spec = pl.BlockSpec((act_tile_rows, _LANE), act_map)

    bytes_accessed = int(
        sf2.size * sf2.dtype.itemsize
        + af.size * af.dtype.itemsize + ar.size * ar.dtype.itemsize
        + fi.size * fi.dtype.itemsize + ri.size * ri.dtype.itemsize
        + num_chunks * _SUBLANE * _LANE * 4)
    cost = pl.CostEstimate(
        flops=int(6 * n_img + 5 * n_act + 2 * n_sf),
        transcendentals=int(n_sf),
        bytes_accessed=bytes_accessed)

    out = pl.pallas_call(
        kernel,
        out_shape=jax.ShapeDtypeStruct((num_chunks, _SUBLANE, _LANE),
                                       jnp.float32),
        grid_spec=pltpu.PrefetchScalarGridSpec(
            num_scalar_prefetch=0,
            grid=(num_chunks, tiles_per_chunk),
            in_specs=[
                pl.BlockSpec((1, n_sf), lambda c, i: (0, 0)),  # Sf: tiny, resident
                act_spec, act_spec,
                img_spec, img_spec,
            ],
            out_specs=pl.BlockSpec((1, _SUBLANE, _LANE), lambda c, i: (c, 0, 0)),
            scratch_shapes=[pltpu.VMEM((_SUBLANE, _LANE), jnp.float32),   # L1 acc
                            pltpu.VMEM((_SUBLANE, _LANE), jnp.float32)],  # MSE acc
        ),
        compiler_params=pltpu.CompilerParams(
            dimension_semantics=("parallel", "arbitrary"),
            vmem_limit_bytes=48 * 1024 * 1024,
        ),
        cost_estimate=cost,
    )(sf2, af, ar, fi, ri)

    return jnp.sum(out[:, 0, 0])


def _reference_loss(Sf, af, ar, fi, ri):
    bce = jnp.mean(-jnp.maximum(jnp.log(Sf.astype(jnp.float32)), -100.0))
    mse = jnp.mean((af.astype(jnp.float32) - ar.astype(jnp.float32)) ** 2)
    l1 = jnp.mean(jnp.abs(fi.astype(jnp.float32) - ri.astype(jnp.float32)))
    return bce + L2_COEF * mse + L1_COEF * l1


if __name__ == "__main__":
    key = jax.random.PRNGKey(0)
    k1, k2, k3, k4, k5, k6, k7 = jax.random.split(key, 7)

    B, C, H, W = 2, 4, 16, 16
    ACT_DIM = 32

    # Sf: discriminator outputs in (0, 1), one per batch element
    Sf = jax.nn.sigmoid(jax.random.normal(k1, (B,), dtype=jnp.float32))
    activation_fake = jax.random.normal(k2, (B, ACT_DIM), dtype=jnp.float32)
    activation_real = jax.random.normal(k3, (B, ACT_DIM), dtype=jnp.float32)
    fake_img = jax.random.normal(k4, (B, C, H, W), dtype=jnp.float32)  # NCHW
    real_img = jax.random.normal(k5, (B, C, H, W), dtype=jnp.float32)  # NCHW

    # Full path, default tiling (single block, single chunk at this size)
    loss_full = jax.block_until_ready(
        generator_loss(Sf, activation_fake, activation_real, fake_img, real_img))
    ref_full = _reference_loss(Sf, activation_fake, activation_real,
                               fake_img, real_img)
    assert jnp.allclose(loss_full, ref_full, rtol=1e-5, atol=1e-5), (loss_full, ref_full)

    # Tiny tiles -> multi-step reduction + the 2-chunk parallel axis exercised
    loss_tiled = jax.block_until_ready(
        generator_loss(Sf, activation_fake, activation_real, fake_img, real_img,
                       max_tile_rows=8))
    assert jnp.allclose(loss_tiled, ref_full, rtol=1e-5, atol=1e-5), (loss_tiled, ref_full)

    # Odd spatial size -> lane padding + in-kernel row masking + clamped steps
    Ho = Wo = 17
    fake_odd = jax.random.normal(k6, (B, C, Ho, Wo), dtype=jnp.float32)
    real_odd = jax.random.normal(k7, (B, C, Ho, Wo), dtype=jnp.float32)
    loss_odd = jax.block_until_ready(
        generator_loss(Sf, activation_fake, activation_real, fake_odd, real_odd,
                       max_tile_rows=8))
    ref_odd = _reference_loss(Sf, activation_fake, activation_real,
                              fake_odd, real_odd)
    assert jnp.allclose(loss_odd, ref_odd, rtol=1e-5, atol=1e-5), (loss_odd, ref_odd)

    # BCE-only path (activation_fake is None)
    loss_bce = jax.block_until_ready(generator_loss(Sf))
    ref_bce = jnp.mean(-jnp.maximum(jnp.log(Sf), -100.0))
    assert jnp.allclose(loss_bce, ref_bce, rtol=1e-5, atol=1e-5), (loss_bce, ref_bce)

    print("KERNEL_OK")
</pallas_src>

<mosaic_0001>
module attributes {stable_mosaic.version = 11 : i64} {
  func.func @_generator_loss_kernel(%arg0: i32, %arg1: i32, %arg2: memref<1x2xf32, #tpu.memory_space<vmem>>, %arg3: memref<8x128xf32, #tpu.memory_space<vmem>>, %arg4: memref<8x128xf32, #tpu.memory_space<vmem>>, %arg5: memref<16x128xf32, #tpu.memory_space<vmem>>, %arg6: memref<16x128xf32, #tpu.memory_space<vmem>>, %arg7: memref<1x8x128xf32, #tpu.memory_space<vmem>>, %arg8: memref<8x128xf32, #tpu.memory_space<vmem>>, %arg9: memref<8x128xf32, #tpu.memory_space<vmem>>) attributes {dimension_semantics = [#tpu.dimension_semantics<parallel>, #tpu.dimension_semantics<arbitrary>], iteration_bounds = array<i64: 1, 1>, scalar_prefetch = 0 : i64, scratch_operands = 2 : i64, tpu.core_type = #tpu.core_type<tc>, window_params = [{pipeline_mode = #tpu.pipeline_mode<synchronous>, transform_indices = @transform_0, window_bounds = array<i64: 1, 2>}, {transform_indices = @transform_1, window_bounds = array<i64: 8, 128>}, {transform_indices = @transform_2, window_bounds = array<i64: 8, 128>}, {transform_indices = @transform_3, window_bounds = array<i64: 16, 128>}, {transform_indices = @transform_4, window_bounds = array<i64: 16, 128>}, {transform_indices = @transform_5, window_bounds = array<i64: 1, 8, 128>}]} {
    %c0_i32 = arith.constant 0 : i32
    %0 = arith.cmpi eq, %arg1, %c0_i32 : i32
    %1 = arith.extui %0 : i1 to i32
    %c0_i32_0 = arith.constant 0 : i32
    %2 = arith.cmpi ne, %1, %c0_i32_0 : i32
    scf.if %2 {
      %cst_18 = arith.constant 0.000000e+00 : f32
      %36 = vector.broadcast %cst_18 : f32 to vector<8x128xf32>
      %c0_19 = arith.constant 0 : index
      %c0_20 = arith.constant 0 : index
      %37 = vector.load %arg8[%c0_19, %c0_20] : memref<8x128xf32, #tpu.memory_space<vmem>>, vector<8x128xf32>
      tpu.vector_store %arg8[%c0_19, %c0_20], %36 {strides = array<i32>} : memref<8x128xf32, #tpu.memory_space<vmem>>, vector<8x128xf32>,
      %cst_21 = arith.constant 0.000000e+00 : f32
      %38 = vector.broadcast %cst_21 : f32 to vector<8x128xf32>
      %c0_22 = arith.constant 0 : index
      %c0_23 = arith.constant 0 : index
      %39 = vector.load %arg9[%c0_22, %c0_23] : memref<8x128xf32, #tpu.memory_space<vmem>>, vector<8x128xf32>
      tpu.vector_store %arg9[%c0_22, %c0_23], %38 {strides = array<i32>} : memref<8x128xf32, #tpu.memory_space<vmem>>, vector<8x128xf32>,
    } else {
    }
    %c1_i32 = arith.constant 1 : i32
    %3 = arith.muli %arg0, %c1_i32 : i32
    %4 = arith.addi %3, %arg1 : i32
    %c16_i32 = arith.constant 16 : i32
    %5 = arith.muli %4, %c16_i32 : i32
    %6 = tpu.iota {dimensions = array<i32: 0>} : vector<16x128xi32>
    %c0_i32_1 = arith.constant 0 : i32
    %c1_i32_2 = arith.constant 1 : i32
    %7 = arith.muli %c0_i32_1, %c1_i32_2 : i32
    %c0_i32_3 = arith.constant 0 : i32
    %8 = arith.addi %c0_i32_3, %7 : i32
    %c16_i32_4 = arith.constant 16 : i32
    %9 = arith.muli %8, %c16_i32_4 : i32
    %10 = tpu.assume_multiple %9, 16 : i32
    %11 = arith.index_cast %10 : i32 to index
    %c0 = arith.constant 0 : index
    %12 = vector.load %arg5[%11, %c0] : memref<16x128xf32, #tpu.memory_space<vmem>>, vector<16x128xf32>
    %13 = arith.index_cast %10 : i32 to index
    %c0_5 = arith.constant 0 : index
    %14 = vector.load %arg6[%13, %c0_5] : memref<16x128xf32, #tpu.memory_space<vmem>>, vector<16x128xf32>
    %15 = arith.addi %5, %10 : i32
    %c16_i32_6 = arith.constant 16 : i32
    %16 = arith.subi %c16_i32_6, %15 : i32
    %17 = vector.broadcast %16 : i32 to vector<16x128xi32>
    %18 = arith.cmpi slt, %6, %17 : vector<16x128xi32>
    %19 = arith.subf %12, %14 : vector<16x128xf32>
    %20 = math.absf %19 : vector<16x128xf32>
    %cst = arith.constant 0.000000e+00 : f32
    %21 = vector.broadcast %cst : f32 to vector<16x128xf32>
    %22 = arith.select %18, %20, %21 : vector<16x128xi1>, vector<16x128xf32>
    %c0_7 = arith.constant 0 : index
    %c0_8 = arith.constant 0 : index
    %23 = vector.load %arg8[%c0_7, %c0_8] : memref<8x128xf32, #tpu.memory_space<vmem>>, vector<8x128xf32>
    %24 = vector.shape_cast %22 : vector<16x128xf32> to vector<2x8x128xf32>
    %cst_9 = arith.constant dense<0.000000e+00> : vector<8x128xf32>
    %25 = vector.multi_reduction <add>, %24, %cst_9 [0] : vector<2x8x128xf32> to vector<8x128xf32>
    %26 = arith.addf %23, %25 : vector<8x128xf32>
    %c0_10 = arith.constant 0 : index
    %c0_11 = arith.constant 0 : index
    %27 = vector.load %arg8[%c0_10, %c0_11] : memref<8x128xf32, #tpu.memory_space<vmem>>, vector<8x128xf32>
    tpu.vector_store %arg8[%c0_10, %c0_11], %26 {strides = array<i32>} : memref<8x128xf32, #tpu.memory_space<vmem>>, vector<8x128xf32>,
    %c1_i32_12 = arith.constant 1 : i32
    %c0_i32_13 = arith.constant 0 : i32
    %28 = arith.cmpi eq, %arg0, %c0_i32_13 : i32
    %c1_i32_14 = arith.constant 1 : i32
    %29 = arith.cmpi slt, %arg1, %c1_i32_14 : i32
    %30 = arith.andi %28, %29 : i1
    %31 = arith.extui %30 : i1 to i32
    %c0_i32_15 = arith.constant 0 : i32
    %32 = arith.cmpi ne, %31, %c0_i32_15 : i32
    scf.if %32 {
      %c0_18 = arith.constant 0 : index
      %c0_19 = arith.constant 0 : index
      %36 = vector.load %arg3[%c0_18, %c0_19] : memref<8x128xf32, #tpu.memory_space<vmem>>, vector<8x128xf32>
      %c0_20 = arith.constant 0 : index
      %c0_21 = arith.constant 0 : index
      %37 = vector.load %arg4[%c0_20, %c0_21] : memref<8x128xf32, #tpu.memory_space<vmem>>, vector<8x128xf32>
      %38 = tpu.iota {dimensions = array<i32: 0>} : vector<8x128xi32>
      %c8_i32 = arith.constant 8 : i32
      %39 = arith.muli %arg1, %c8_i32 : i32
      %c8_i32_22 = arith.constant 8 : i32
      %40 = arith.subi %c8_i32_22, %39 : i32
      %41 = vector.broadcast %40 : i32 to vector<8x128xi32>
      %42 = arith.cmpi slt, %38, %41 : vector<8x128xi32>
      %43 = arith.subf %36, %37 : vector<8x128xf32>
      %cst_23 = arith.constant 0.000000e+00 : f32
      %44 = vector.broadcast %cst_23 : f32 to vector<8x128xf32>
      %45 = arith.select %42, %43, %44 : vector<8x128xi1>, vector<8x128xf32>
      %c0_24 = arith.constant 0 : index
      %c0_25 = arith.constant 0 : index
      %46 = vector.load %arg9[%c0_24, %c0_25] : memref<8x128xf32, #tpu.memory_space<vmem>>, vector<8x128xf32>
      %47 = arith.mulf %45, %45 : vector<8x128xf32>
      %48 = vector.shape_cast %47 : vector<8x128xf32> to vector<1x8x128xf32>
      %cst_26 = arith.constant dense<0.000000e+00> : vector<8x128xf32>
      %49 = vector.multi_reduction <add>, %48, %cst_26 [0] : vector<1x8x128xf32> to vector<8x128xf32>
      %50 = arith.addf %46, %49 : vector<8x128xf32>
      %c0_27 = arith.constant 0 : index
      %c0_28 = arith.constant 0 : index
      %51 = vector.load %arg9[%c0_27, %c0_28] : memref<8x128xf32, #tpu.memory_space<vmem>>, vector<8x128xf32>
      tpu.vector_store %arg9[%c0_27, %c0_28], %50 {strides = array<i32>} : memref<8x128xf32, #tpu.memory_space<vmem>>, vector<8x128xf32>,
    } else {
    }
    %c0_i32_16 = arith.constant 0 : i32
    %33 = arith.cmpi eq, %arg1, %c0_i32_16 : i32
    %34 = arith.extui %33 : i1 to i32
    %c0_i32_17 = arith.constant 0 : i32
    %35 = arith.cmpi ne, %34, %c0_i32_17 : i32
    scf.if %35 {
      %c0_18 = arith.constant 0 : index
      %c0_19 = arith.constant 0 : index
      %36 = vector.load %arg8[%c0_18, %c0_19] : memref<8x128xf32, #tpu.memory_space<vmem>>, vector<8x128xf32>
      %37 = vector.shape_cast %36 : vector<8x128xf32> to vector<1x8x128xf32>
      %cst_20 = arith.constant dense<0.000000e+00> : vector<1xf32>
      %38 = vector.multi_reduction <add>, %37, %cst_20 [1, 2] : vector<1x8x128xf32> to vector<1xf32>
      %39 = vector.shape_cast %38 : vector<1xf32> to vector<1x1x1xf32>
      %40 = vector.extract %39[0, 0, 0] : f32 from vector<1x1x1xf32>
      %cst_21 = arith.constant 4.8828125E-4 : f32
      %41 = arith.mulf %40, %cst_21 : f32
      %c0_22 = arith.constant 0 : index
      %c0_23 = arith.constant 0 : index
      %42 = vector.load %arg9[%c0_22, %c0_23] : memref<8x128xf32, #tpu.memory_space<vmem>>, vector<8x128xf32>
      %43 = vector.shape_cast %42 : vector<8x128xf32> to vector<1x8x128xf32>
      %cst_24 = arith.constant dense<0.000000e+00> : vector<1xf32>
      %44 = vector.multi_reduction <add>, %43, %cst_24 [1, 2] : vector<1x8x128xf32> to vector<1xf32>
      %45 = vector.shape_cast %44 : vector<1xf32> to vector<1x1x1xf32>
      %46 = vector.extract %45[0, 0, 0] : f32 from vector<1x1x1xf32>
      %cst_25 = arith.constant 1.562500e-02 : f32
      %47 = arith.mulf %46, %cst_25 : f32
      %c0_26 = arith.constant 0 : index
      %c0_27 = arith.constant 0 : index
      %48 = vector.load %arg2[%c0_26, %c0_27] : memref<1x2xf32, #tpu.memory_space<vmem>>, vector<1x2xf32>
      %49 = math.log %48 : vector<1x2xf32>
      %cst_28 = arith.constant -1.000000e+02 : f32
      %50 = vector.broadcast %cst_28 : f32 to vector<1x2xf32>
      %51 = arith.maximumf %49, %50 : vector<1x2xf32>
      %52 = vector.shape_cast %51 : vector<1x2xf32> to vector<1x1x2xf32>
      %cst_29 = arith.constant dense<0.000000e+00> : vector<1xf32>
      %53 = vector.multi_reduction <add>, %52, %cst_29 [1, 2] : vector<1x1x2xf32> to vector<1xf32>
      %54 = vector.shape_cast %53 : vector<1xf32> to vector<1x1x1xf32>
      %55 = vector.extract %54[0, 0, 0] : f32 from vector<1x1x1xf32>
      %cst_30 = arith.constant 0.000000e+00 : f32
      %56 = arith.subf %cst_30, %55 : f32
      %cst_31 = arith.constant 5.000000e-01 : f32
      %57 = arith.mulf %56, %cst_31 : f32
      %cst_32 = arith.constant 5.000000e+01 : f32
      %58 = arith.mulf %cst_32, %41 : f32
      %cst_33 = arith.constant 1.000000e+02 : f32
      %59 = arith.mulf %cst_33, %47 : f32
      %60 = arith.addf %58, %59 : f32
      %c0_i32_34 = arith.constant 0 : i32
      %61 = arith.cmpi eq, %arg0, %c0_i32_34 : i32
      %cst_35 = arith.constant 0.000000e+00 : f32
      %62 = arith.select %61, %57, %cst_35 : f32
      %63 = arith.addf %60, %62 : f32
      %64 = vector.broadcast %63 : f32 to vector<1x8x128xf32>
      %c0_36 = arith.constant 0 : index
      %c0_37 = arith.constant 0 : index
      %c0_38 = arith.constant 0 : index
      %65 = vector.load %arg7[%c0_36, %c0_37, %c0_38] : memref<1x8x128xf32, #tpu.memory_space<vmem>>, vector<1x8x128xf32>
      tpu.vector_store %arg7[%c0_36, %c0_37, %c0_38], %64 {strides = array<i32>} : memref<1x8x128xf32, #tpu.memory_space<vmem>>, vector<1x8x128xf32>,
    } else {
    }
    return
  }
  func.func @transform_0(%arg0: i32, %arg1: i32) -> (i32, i32) {
    %c0_i32 = arith.constant 0 : i32
    %c0_i32_0 = arith.constant 0 : i32
    %c0_i32_1 = arith.constant 0 : i32
    return %c0_i32, %c0_i32_0 : i32, i32
  }
  func.func @transform_1(%arg0: i32, %arg1: i32) -> (i32, i32) {
    %c0_i32 = arith.constant 0 : i32
    %0 = arith.cmpi eq, %arg0, %c0_i32 : i32
    %c0_i32_0 = arith.constant 0 : i32
    %1 = arith.minsi %arg1, %c0_i32_0 : i32
    %c0_i32_1 = arith.constant 0 : i32
    %2 = arith.select %0, %1, %c0_i32_1 : i32
    %c0_i32_2 = arith.constant 0 : i32
    %c0_i32_3 = arith.constant 0 : i32
    return %2, %c0_i32_2 : i32, i32
  }
  func.func @transform_2(%arg0: i32, %arg1: i32) -> (i32, i32) {
    %c0_i32 = arith.constant 0 : i32
    %0 = arith.cmpi eq, %arg0, %c0_i32 : i32
    %c0_i32_0 = arith.constant 0 : i32
    %1 = arith.minsi %arg1, %c0_i32_0 : i32
    %c0_i32_1 = arith.constant 0 : i32
    %2 = arith.select %0, %1, %c0_i32_1 : i32
    %c0_i32_2 = arith.constant 0 : i32
    %c0_i32_3 = arith.constant 0 : i32
    return %2, %c0_i32_2 : i32, i32
  }
  func.func @transform_3(%arg0: i32, %arg1: i32) -> (i32, i32) {
    %c1_i32 = arith.constant 1 : i32
    %0 = arith.muli %arg0, %c1_i32 : i32
    %1 = arith.addi %0, %arg1 : i32
    %c0_i32 = arith.constant 0 : i32
    %2 = arith.minsi %1, %c0_i32 : i32
    %c0_i32_0 = arith.constant 0 : i32
    %c0_i32_1 = arith.constant 0 : i32
    return %2, %c0_i32_0 : i32, i32
  }
  func.func @transform_4(%arg0: i32, %arg1: i32) -> (i32, i32) {
    %c1_i32 = arith.constant 1 : i32
    %0 = arith.muli %arg0, %c1_i32 : i32
    %1 = arith.addi %0, %arg1 : i32
    %c0_i32 = arith.constant 0 : i32
    %2 = arith.minsi %1, %c0_i32 : i32
    %c0_i32_0 = arith.constant 0 : i32
    %c0_i32_1 = arith.constant 0 : i32
    return %2, %c0_i32_0 : i32, i32
  }
  func.func @transform_5(%arg0: i32, %arg1: i32) -> (i32, i32, i32) {
    %c0_i32 = arith.constant 0 : i32
    %c0_i32_0 = arith.constant 0 : i32
    %c0_i32_1 = arith.constant 0 : i32
    return %arg0, %c0_i32, %c0_i32_0 : i32, i32, i32
  }
}

</mosaic_0001>

<llo_original>
// kernel: tpu_custom_call.1
$region0: #{tpu_custom_call.1}
  #allocation0 [shape = 'u32[]', space=smem, size = 0x4, offset = 0x4, fixed_abs, tag = 'smem constant byte address 0x4 - core index']
  #allocation1 [shape = 'u32[144,128]{1,0:T(1,128)}', space=vmem, size = 0x12000, scoped, tag = 'internal scratch']
  #allocation2 [shape = 'f32[8,128]{1,0:T(8,128)}', space=vmem, size = 0x1000, scoped, tag = 'scratch operand']
  #allocation3 [shape = 'f32[8,128]{1,0:T(8,128)}', space=vmem, size = 0x1000, scoped, tag = 'scratch operand']
  %s0 = inlined_call_operand.hbm [shape: f32[1,2], index: 0, kind: input, shape index: {}]
  %s1 = inlined_call_operand.hbm [shape: f32[8,128], index: 1, kind: input, shape index: {}]
  %s2 = inlined_call_operand.hbm [shape: f32[8,128], index: 2, kind: input, shape index: {}]
  %s3 = inlined_call_operand.hbm [shape: f32[16,128], index: 3, kind: input, shape index: {}]
  %s4 = inlined_call_operand.hbm [shape: f32[16,128], index: 4, kind: input, shape index: {}]
  %s5 = inlined_call_operand.hbm [shape: f32[1,8,128], index: 5, kind: output, shape index: {}]
  %s6 = sld [smem:[#allocation0]]
  $region62: #{tpu_custom_call.1} parent=0
    _
  %s8 = ssub.s32 1, %s6
  %s9 = scalar_select 0, %s8, %s6
  $region1: #{tpu_custom_call.1} parent=0
    #allocation4 [shape = 'u8[512]{0}', space=vmem, size = 0x400, scoped, tag = 'input window, operand 0, single buffered']
    #allocation5 [shape = 's32[1]{0}', space=sflag, size = 0x4, scoped, tag = 'scoped memory for tpu_custom_call.1']
    #allocation6 [shape = 's32[1]{0}', space=sflag, size = 0x4, scoped, tag = 'scoped memory for tpu_custom_call.1']
    #allocation7 [shape = 'u8[4096]{0}', space=vmem, size = 0x1000, scoped, tag = 'input window, operand 1, single buffered']
    #allocation8 [shape = 's32[1]{0}', space=sflag, size = 0x4, scoped, tag = 'scoped memory for tpu_custom_call.1']
    #allocation9 [shape = 'u8[4096]{0}', space=vmem, size = 0x1000, scoped, tag = 'input window, operand 2, single buffered']
    #allocation10 [shape = 'u8[8192]{0}', space=vmem, size = 0x2000, scoped, tag = 'input window, operand 3, single buffered']
    #allocation11 [shape = 's32[1]{0}', space=sflag, size = 0x4, scoped, tag = 'scoped memory for tpu_custom_call.1']
    #allocation12 [shape = 'u8[8192]{0}', space=vmem, size = 0x2000, scoped, tag = 'input window, operand 4, single buffered']
    #allocation13 [shape = 'u8[4096]{0}', space=vmem, size = 0x1000, scoped, tag = 'output window, operand 0, single buffered']
    %10 = vsyncpa [#allocation5], 0
    %11 = vsyncpa [#allocation8], 0
    %12 = vsyncpa [#allocation11], 0
    %13 = vsyncpa [#allocation6], 0
    // Predicated region
    $region2: #{tpu_custom_call.1} parent=1 // pred_check
      _
    $region3: #{tpu_custom_call.1} parent=1 // pred_check_branch
      %15 = sbr.rel (0) target = $region5
    $region4: #{tpu_custom_call.1} parent=1 // pred_region
      %s17 = ssub.s32 16, 16
      %18 = vsyncadd [#allocation5], %s17
      %s20 = sshll.u32 [#allocation4], 4
      %s21 = int_to_ptr.vmem [resolvable:$true] %s20
      %23 = dma.hbm_to_vmem [thread:$0]  %s0, 16, %s21, [#allocation5]
    $region5: #{tpu_custom_call.1} parent=1 // pred_fallthru
      _
    // Predicated region
    $region6: #{tpu_custom_call.1} parent=1 // pred_check
      _
    $region7: #{tpu_custom_call.1} parent=1 // pred_check_branch
      %25 = sbr.rel (0) target = $region9
    $region8: #{tpu_custom_call.1} parent=1 // pred_region
      %p26 = scmp.eq.s32.totalorder 0, 0
      %s27 = scalar_select %p26, 0, 0
      %s29 = ssub.s32 128, 128
      %30 = vsyncadd [#allocation8], %s29
      %s31 = smul.addr %s27, 128
      %s32 = scalar_lea.hbm %s1, %s31
      %s34 = sshll.u32 [#allocation7], 4
      %s35 = int_to_ptr.vmem [resolvable:$true] %s34
      %37 = dma.hbm_to_vmem [thread:$0]  %s32, 128, %s35, [#allocation8]
    $region9: #{tpu_custom_call.1} parent=1 // pred_fallthru
      _
    // Predicated region
    $region10: #{tpu_custom_call.1} parent=1 // pred_check
      _
    $region11: #{tpu_custom_call.1} parent=1 // pred_check_branch
      %39 = sbr.rel (0) target = $region13
    $region12: #{tpu_custom_call.1} parent=1 // pred_region
      %p40 = scmp.eq.s32.totalorder 0, 0
      %s41 = scalar_select %p40, 0, 0
      %s43 = ssub.s32 128, 128
      %44 = vsyncadd [#allocation8], %s43
      %s45 = smul.addr %s41, 128
      %s46 = scalar_lea.hbm %s2, %s45
      %s48 = sshll.u32 [#allocation9], 4
      %s49 = int_to_ptr.vmem [resolvable:$true] %s48
      %51 = dma.hbm_to_vmem [thread:$0]  %s46, 128, %s49, [#allocation8]
    $region13: #{tpu_custom_call.1} parent=1 // pred_fallthru
      _
    // Predicated region
    $region14: #{tpu_custom_call.1} parent=1 // pred_check
      _
    $region15: #{tpu_custom_call.1} parent=1 // pred_check_branch
      %53 = sbr.rel (0) target = $region17
    $region16: #{tpu_custom_call.1} parent=1 // pred_region
      %s54 = sadd.s32 0, 0
      %p55 = scmp.lt.s32.totalorder %s54, 0
      %s56 = scalar_select %p55, %s54, 0
      %s57 = smul.u32 2, %s56
      %s59 = ssub.s32 256, 256
      %60 = vsyncadd [#allocation11], %s59
      %s61 = smul.addr %s57, 128
      %s62 = scalar_lea.hbm %s3, %s61
      %s63 = sshll.u32 [#allocation10], 4
      %s64 = int_to_ptr.vmem [resolvable:$true] %s63
      %69 = dma.hbm_to_vmem [thread:$0]  %s62, 256, %s64, [#allocation11], 128, 128, 8
    $region17: #{tpu_custom_call.1} parent=1 // pred_fallthru
      _
    // Predicated region
    $region18: #{tpu_custom_call.1} parent=1 // pred_check
      _
    $region19: #{tpu_custom_call.1} parent=1 // pred_check_branch
      %71 = sbr.rel (0) target = $region21
    $region20: #{tpu_custom_call.1} parent=1 // pred_region
      %s72 = sadd.s32 0, 0
      %p73 = scmp.lt.s32.totalorder %s72, 0
      %s74 = scalar_select %p73, %s72, 0
      %s75 = smul.u32 2, %s74
      %s77 = ssub.s32 256, 256
      %78 = vsyncadd [#allocation11], %s77
      %s79 = smul.addr %s75, 128
      %s80 = scalar_lea.hbm %s4, %s79
      %s81 = sshll.u32 [#allocation12], 4
      %s82 = int_to_ptr.vmem [resolvable:$true] %s81
      %87 = dma.hbm_to_vmem [thread:$0]  %s80, 256, %s82, [#allocation11], 128, 128, 8
    $region21: #{tpu_custom_call.1} parent=1 // pred_fallthru
      _
    // Predicated region
    $region22: #{tpu_custom_call.1} parent=1 // pred_check
      _
    $region23: #{tpu_custom_call.1} parent=1 // pred_check_branch
      %89 = sbr.rel (0) target = $region25
    $region24: #{tpu_custom_call.1} parent=1 // pred_region
      %90 = dma.done [#allocation5], 16
    $region25: #{tpu_custom_call.1} parent=1 // pred_fallthru
      _
    // Predicated region
    $region26: #{tpu_custom_call.1} parent=1 // pred_check
      _
    $region27: #{tpu_custom_call.1} parent=1 // pred_check_branch
      %92 = sbr.rel (0) target = $region29
    $region28: #{tpu_custom_call.1} parent=1 // pred_region
      %93 = dma.done [#allocation8], 128
    $region29: #{tpu_custom_call.1} parent=1 // pred_fallthru
      _
    // Predicated region
    $region30: #{tpu_custom_call.1} parent=1 // pred_check
      _
    $region31: #{tpu_custom_call.1} parent=1 // pred_check_branch
      %95 = sbr.rel (0) target = $region33
    $region32: #{tpu_custom_call.1} parent=1 // pred_region
      %96 = dma.done [#allocation8], 128
    $region33: #{tpu_custom_call.1} parent=1 // pred_fallthru
      _
    // Predicated region
    $region34: #{tpu_custom_call.1} parent=1 // pred_check
      _
    $region35: #{tpu_custom_call.1} parent=1 // pred_check_branch
      %98 = sbr.rel (0) target = $region37
    $region36: #{tpu_custom_call.1} parent=1 // pred_region
      %99 = dma.done [#allocation11], 256
    $region37: #{tpu_custom_call.1} parent=1 // pred_fallthru
      _
    // Predicated region
    $region38: #{tpu_custom_call.1} parent=1 // pred_check
      _
    $region39: #{tpu_custom_call.1} parent=1 // pred_check_branch
      %101 = sbr.rel (0) target = $region41
    $region40: #{tpu_custom_call.1} parent=1 // pred_region
      %102 = dma.done [#allocation11], 256
    $region41: #{tpu_custom_call.1} parent=1 // pred_fallthru
      _
    %p103 = scmp.eq.s32.totalorder 0, 0
    %s104 = scalar_select %p103, 0, 0
    %p105 = scmp.eq.s32.totalorder 0, 0
    %s106 = scalar_select %p105, 0, 0
    %s107 = sadd.s32 0, 0
    %p108 = scmp.lt.s32.totalorder %s107, 0
    %s109 = scalar_select %p108, %s107, 0
    %s110 = smul.u32 2, %s109
    %s111 = sadd.s32 0, 0
    %p112 = scmp.lt.s32.totalorder %s111, 0
    %s113 = scalar_select %p112, %s111, 0
    %s114 = smul.u32 2, %s113
    %p115 = scmp.eq.s32.totalorder 0, 0
    // Predicated region
    $region42: #{tpu_custom_call.1} parent=1 // pred_check
      %p116 = pneg %p115
    $region43: #{tpu_custom_call.1} parent=1 // pred_check_branch
      %118 = sbr.rel (%p116) target = $region45
    $region44: #{tpu_custom_call.1} parent=1 // pred_region
      %119 = vst [vmem:[#allocation2] sm:$0xff] 0.0
      %120 = vst [vmem:[#allocation3] sm:$0xff] 0.0
    $region45: #{tpu_custom_call.1} parent=1 // pred_fallthru
      _
    %s121 = sadd.s32 0, 0
    %s122 = smul.u32 %s121, 16
    %v123 = vlaneseq
    %v124 = vshrl.u32 %v123, 7
    %v125 = vadd.s32 %v124, 8
    %v126 = vld [vmem:[#allocation10] sm:$0xff]
    %v127 = vld [vmem:[#allocation10 + $0x8] sm:$0xff]
    %v128 = vld [vmem:[#allocation12] sm:$0xff]
    %v129 = vld [vmem:[#allocation12 + $0x8] sm:$0xff]
    %s130 = sadd.s32 %s122, 0
    %s131 = ssub.s32 16, %s130
    %v132 = vstv %s131
    %vm133 = vcmp.lt.s32.totalorder %v124, %v132
    %vm134 = vcmp.lt.s32.totalorder %v125, %v132
    %v135 = vsub.f32 %v126, %v128
    %v136 = vsub.f32 %v127, %v129
    %v137 = vand.u32 2147483647, %v135
    %v138 = vand.u32 2147483647, %v136
    %v139 = vsel %vm133, %v137, 0.0
    %v140 = vsel %vm134, %v138, 0.0
    %v141 = vld [vmem:[#allocation2] sm:$0xff]
    %v142 = vadd.f32 %v139, %v140
    %v143 = vadd.f32 %v141, %v142
    %144 = vst [vmem:[#allocation2] sm:$0xff] %v143
    %p145 = scmp.eq.s32.totalorder 0, 0
    %p146 = scmp.lt.s32.totalorder 0, 1
    %p147 = pnand %p145, %p146
    %p148 = pneg %p147
    // Predicated region
    $region46: #{tpu_custom_call.1} parent=1 // pred_check
      _
    $region47: #{tpu_custom_call.1} parent=1 // pred_check_branch
      %150 = sbr.rel (%p147) target = $region49
    $region48: #{tpu_custom_call.1} parent=1 // pred_region
      %v151 = vld [vmem:[#allocation7] sm:$0xff]
      %v152 = vld [vmem:[#allocation9] sm:$0xff]
      %s153 = smul.u32 0, 8
      %s154 = ssub.s32 8, %s153
      %v155 = vstv %s154
      %vm156 = vcmp.lt.s32.totalorder %v124, %v155
      %v157 = vsub.f32 %v151, %v152
      %v158 = vsel %vm156, %v157, 0.0
      %v159 = vld [vmem:[#allocation3] sm:$0xff]
      %v160 = vmul.f32 %v158, %v158
      %v161 = vadd.f32 %v160, 0.0
      %v162 = vadd.f32 %v159, %v161
      %163 = vst [vmem:[#allocation3] sm:$0xff] %v162
    $region49: #{tpu_custom_call.1} parent=1 // pred_fallthru
      _
    // Predicated region
    $region50: #{tpu_custom_call.1} parent=1 // pred_check
      %p164 = pneg %p115
    $region51: #{tpu_custom_call.1} parent=1 // pred_check_branch
      %166 = sbr.rel (%p164) target = $region53
    $region52: #{tpu_custom_call.1} parent=1 // pred_region
      %v167 = vld [vmem:[#allocation2] sm:$0xff]
      %168 = vadd.xlane.f32.xlu0 %v167
      %v169 = vpop.xlane.xlu0 %168
      %v170 = vrot.slane %v169, 4
      %v171 = vadd.f32 %v169, %v170
      %v172 = vrot.slane %v171, 2
      %v173 = vadd.f32 %v171, %v172
      %v174 = vrot.slane %v173, 1
      %v175 = vadd.f32 %v173, %v174
      %s176 = vtos %v175
      %s177 = smul.f32 %s176, 0.00048828125
      %v178 = vld [vmem:[#allocation3] sm:$0xff]
      %179 = vadd.xlane.f32.xlu0 %v178
      %v180 = vpop.xlane.xlu0 %179
      %v181 = vrot.slane %v180, 4
      %v182 = vadd.f32 %v180, %v181
      %v183 = vrot.slane %v182, 2
      %v184 = vadd.f32 %v182, %v183
      %v185 = vrot.slane %v184, 1
      %v186 = vadd.f32 %v184, %v185
      %s187 = vtos %v186
      %s188 = smul.f32 %s187, 0.015625
      %v189 = vld [vmem:[#allocation4] sm:$0x1]
      %v190 = vlog2.pop %v189
      %v191 = vmul.f32 %v190, 0.6931472
      %v192 = vmax.f32 %v191, -100.0
      %vm193 = vcmask 8192
      %v194 = vsel %vm193, %v192, 0.0
      %195 = vadd.xlane.f32.xlu0 %v194
      %v196 = vpop.xlane.xlu0 %195
      %v197 = vrot.slane %v196, 4
      %v198 = vadd.f32 %v196, %v197
      %v199 = vrot.slane %v198, 2
      %v200 = vadd.f32 %v198, %v199
      %v201 = vrot.slane %v200, 1
      %v202 = vadd.f32 %v200, %v201
      %s203 = vtos %v202
      %s204 = ssub.f32 0.0, %s203
      %s205 = smul.f32 %s204, 0.5
      %s206 = smul.f32 %s177, 50.0
      %s207 = smul.f32 %s188, 100.0
      %s208 = sadd.f32 %s206, %s207
      %s209 = scalar_select %p145, %s205, 0.0
      %s210 = sadd.f32 %s208, %s209
      %v211 = vstv %s210
      %212 = vst [vmem:[#allocation13] sm:$0xff] %v211
    $region53: #{tpu_custom_call.1} parent=1 // pred_fallthru
      _
    // Predicated region
    $region54: #{tpu_custom_call.1} parent=1 // pred_check
      _
    $region55: #{tpu_custom_call.1} parent=1 // pred_check_branch
      %214 = sbr.rel (0) target = $region57
    $region56: #{tpu_custom_call.1} parent=1 // pred_region
      %s216 = ssub.s32 128, 128
      %217 = vsyncadd [#allocation6], %s216
      %s219 = sshll.u32 [#allocation13], 4
      %s220 = int_to_ptr.vmem [resolvable:$true] %s219
      %222 = dma.vmem_to_hbm [thread:$0]  %s220, 128, %s5, [#allocation6]
    $region57: #{tpu_custom_call.1} parent=1 // pred_fallthru
      _
    // Predicated region
    $region58: #{tpu_custom_call.1} parent=1 // pred_check
      _
    $region59: #{tpu_custom_call.1} parent=1 // pred_check_branch
      %224 = sbr.rel (0) target = $region61
    $region60: #{tpu_custom_call.1} parent=1 // pred_region
      %225 = dma.done [#allocation6], 128
    $region61: #{tpu_custom_call.1} parent=1 // pred_fallthru
      _
    %226 = vsyncpa [#allocation5], 1
    %227 = vsyncpa [#allocation8], 1
    %228 = vsyncpa [#allocation11], 1
    %229 = vsyncpa [#allocation6], 1

</llo_original>
